<compile_context>
chip_gen: v5e
topology: v5e:2x2
jax: 0.10.0
libtpu: 0.0.40
codegen_flags: <defaults>
</compile_context>

<pallas_src>
import functools

import jax
import jax.numpy as jnp
from jax.experimental import pallas as pl
from jax.experimental.pallas import tpu as pltpu


def _pick_vmem_limit_bytes():
    """Per-generation VMEM budget: ~0.75 * physical, capped at 96 MiB.

    ~48 MiB on v7x (64 MiB physical, leave headroom for Mosaic scratch) and
    96 MiB on v5e/v6e (128 MiB physical)."""
    try:
        cap = getattr(pltpu.get_tpu_info(), "vmem_capacity_bytes",
                      128 * 1024 * 1024)
    except Exception:
        cap = 128 * 1024 * 1024
    return int(min(0.75 * cap, 96 * 1024 * 1024))


def _conv_kernel(x_ref, w_ref, b_ref, o_ref, p_ref, *, kh, kw, wp, l_out, stride):
    """Fused patch extraction + single GEMM for one batch element.

    x_ref: (1, C_in, Hp*Wp)        flattened reflection-padded image (VMEM)
    w_ref: (C_out, KH*KW*C_in)     fused-contraction weights (tap-major, chan-minor)
    b_ref: (C_out, 1)              bias column (f32)
    o_ref: (1, C_out, Ho*Wp)       lane-dense NCHW-flat output; only the first
                                   l_out = (Ho-1)*Wp + Wo lanes are written, the
                                   tail (and per-row wrap lanes) are discarded
                                   by the wrapper's column slice.
    p_ref: (KH*KW*C_in, l_out)     VMEM scratch holding the fused RHS ("VMEM
                                   im2col" -- never touches HBM).
    """
    c_in = x_ref.shape[1]
    xv = x_ref[0]                                       # (C_in, Hp*Wp)

    # Build the fused-contraction RHS from lane-shifted views of the flat
    # padded image: tap (i, j) of output pixel m = y*Wp + x lives at flat
    # offset i*Wp + j + stride*m  ("flat run" trick).
    for t in range(kh * kw):
        i, j = divmod(t, kw)
        start = i * wp + j
        if stride == 1:
            tap = xv[:, start:start + l_out]            # (C_in, L) unit-stride
        else:
            # TODO(synk): pre-decimate columns in the wrapper for stride>1 so
            # this load is unit-stride (strided lane loads may lower to gathers).
            tap = x_ref[0, :, pl.ds(start, l_out, stride=stride)]
        p_ref[t * c_in:(t + 1) * c_in, :] = tap

    # One MXU matmul with K = C_in*KH*KW (instead of KH*KW dots with K = C_in),
    # f32 accumulation regardless of input dtype.
    acc = jnp.dot(w_ref[...], p_ref[...], preferred_element_type=jnp.float32)

    # Bias in the single epilogue add; one cast + (mostly lane-dense) store.
    o_ref[0, :, :l_out] = (acc + b_ref[...]).astype(o_ref.dtype)


def conv_layer_forward(x, weight, bias, stride=1, compute_dtype=None):
    """Equivalent of ConvLayer.forward (ReflectionPad2d(k//2) + Conv2d).

    x:      (N, C_in, H, W)        float32, NCHW
    weight: (C_out, C_in, KH, KW)  float32, OIHW (PyTorch layout)
    bias:   (C_out,)               float32
    compute_dtype: None (= x.dtype, exact) or jnp.bfloat16 for bf16 MXU inputs
                   with f32 accumulation (perf option, v6e/v7x native).
    """
    n, c_in, h, w = x.shape
    c_out, c_in_w, kh, kw = weight.shape
    assert c_in == c_in_w and kh == kw, "square kernel expected (Conv2d(kernel_size=int))"
    pad = kh // 2
    assert pad < h and pad < w, "reflection pad must be smaller than the spatial dims"

    cdt = x.dtype if compute_dtype is None else compute_dtype

    # ReflectionPad2d — jnp 'reflect' matches PyTorch (edge not repeated).
    # Cast first so the padded HBM copy is already in the compute dtype.
    xp = jnp.pad(x.astype(cdt), ((0, 0), (0, 0), (pad, pad), (pad, pad)),
                 mode="reflect")
    hp, wp = xp.shape[2], xp.shape[3]
    h_out = (hp - kh) // stride + 1
    w_out = (wp - kw) // stride + 1
    l_out = (h_out - 1) * wp + w_out        # flat output length incl. wrap lanes

    x_flat = xp.reshape(n, c_in, hp * wp)   # contiguous -> free metadata reshape

    # Fused-contraction weights: W2[o, (i*kw + j)*C_in + c] = weight[o, c, i, j],
    # matching the tap-major / channel-minor stacking order used in the kernel.
    w2 = weight.transpose(0, 2, 3, 1).reshape(c_out, kh * kw * c_in).astype(cdt)
    b_col = bias.reshape(c_out, 1).astype(jnp.float32)

    kernel = functools.partial(_conv_kernel, kh=kh, kw=kw, wp=wp,
                               l_out=l_out, stride=stride)

    out_flat = pl.pallas_call(
        kernel,
        out_shape=jax.ShapeDtypeStruct((n, c_out, h_out * wp), x.dtype),
        grid=(n,),  # one step per image; "parallel" -> one per TC on v7x at N>=2
        in_specs=[
            pl.BlockSpec((1, c_in, hp * wp), lambda b: (b, 0, 0)),
            pl.BlockSpec((c_out, kh * kw * c_in), lambda b: (0, 0)),
            pl.BlockSpec((c_out, 1), lambda b: (0, 0)),
        ],
        out_specs=pl.BlockSpec((1, c_out, h_out * wp), lambda b: (b, 0, 0)),
        scratch_shapes=[pltpu.VMEM((kh * kw * c_in, l_out), cdt)],
        compiler_params=pltpu.CompilerParams(
            dimension_semantics=("parallel",),
            vmem_limit_bytes=_pick_vmem_limit_bytes(),
        ),
    )(x_flat, w2, b_col)

    # out_flat already holds the NCHW-flat result (row pitch = wp) in its first
    # l_out lanes; a free reshape + column slice recovers (N, C_out, Ho, Wo).
    # No jnp.pad pass: the h_out*wp - l_out tail lanes (and the per-row wrap
    # lanes) land only in columns >= w_out, which are dropped here.
    return out_flat.reshape(n, c_out, h_out, wp)[:, :, :, :w_out]


def _reference_forward(x, weight, bias, stride):
    pad = weight.shape[2] // 2
    xp = jnp.pad(x, ((0, 0), (0, 0), (pad, pad), (pad, pad)), mode="reflect")
    y = jax.lax.conv_general_dilated(
        xp, weight, window_strides=(stride, stride), padding="VALID",
        dimension_numbers=("NCHW", "OIHW", "NCHW"))
    return y + bias[None, :, None, None]


if __name__ == "__main__":
    # ConvLayer(in_channels=4, out_channels=8, kernel_size=3, stride=1)
    in_channels, out_channels, kernel_size, stride = 4, 8, 3, 1
    batch, spatial = 2, 16

    key = jax.random.PRNGKey(0)
    kx, kw_, kb = jax.random.split(key, 3)
    x = jax.random.normal(kx, (batch, in_channels, spatial, spatial), jnp.float32)
    weight = 0.1 * jax.random.normal(
        kw_, (out_channels, in_channels, kernel_size, kernel_size), jnp.float32)
    bias = 0.1 * jax.random.normal(kb, (out_channels,), jnp.float32)

    y_ref = _reference_forward(x, weight, bias, stride)

    # Exact path (matches the PyTorch module's f32 conv).
    y = jax.block_until_ready(conv_layer_forward(x, weight, bias, stride))
    assert y.shape == y_ref.shape == (batch, out_channels, spatial, spatial)
    assert jnp.allclose(y, y_ref, atol=1e-4, rtol=1e-4), "f32 mismatch vs reference conv"

    # bf16 MXU-input path (f32 accumulation) -- perf option, relaxed tolerance.
    y_bf = jax.block_until_ready(
        conv_layer_forward(x, weight, bias, stride, compute_dtype=jnp.bfloat16))
    assert y_bf.shape == y_ref.shape
    assert jnp.allclose(y_bf, y_ref, atol=3e-2, rtol=3e-2), "bf16 mismatch vs reference conv"

    print("KERNEL_OK")
</pallas_src>

<mosaic_0001>
module attributes {stable_mosaic.version = 11 : i64} {
  func.func @_conv_kernel(%arg0: i32, %arg1: memref<1x4x324xf32, #tpu.memory_space<vmem>>, %arg2: memref<8x36xf32, #tpu.memory_space<vmem>>, %arg3: memref<8x1xf32, #tpu.memory_space<vmem>>, %arg4: memref<1x8x288xf32, #tpu.memory_space<vmem>>, %arg5: memref<36x286xf32, #tpu.memory_space<vmem>>) attributes {dimension_semantics = [#tpu.dimension_semantics<parallel>], iteration_bounds = array<i64: 2>, scalar_prefetch = 0 : i64, scratch_operands = 1 : i64, tpu.core_type = #tpu.core_type<tc>, window_params = [{transform_indices = @transform_0, window_bounds = array<i64: 1, 4, 324>}, {pipeline_mode = #tpu.pipeline_mode<synchronous>, transform_indices = @transform_1, window_bounds = array<i64: 8, 36>}, {pipeline_mode = #tpu.pipeline_mode<synchronous>, transform_indices = @transform_2, window_bounds = array<i64: 8, 1>}, {transform_indices = @transform_3, window_bounds = array<i64: 1, 8, 288>}]} {
    %c0 = arith.constant 0 : index
    %c0_0 = arith.constant 0 : index
    %c0_1 = arith.constant 0 : index
    %0 = vector.load %arg1[%c0, %c0_0, %c0_1] : memref<1x4x324xf32, #tpu.memory_space<vmem>>, vector<1x4x324xf32>
    %1 = vector.shape_cast %0 : vector<1x4x324xf32> to vector<4x324xf32>
    %2 = vector.extract_strided_slice %1 {offsets = [0, 0], sizes = [4, 286], strides = [1, 1]} : vector<4x324xf32> to vector<4x286xf32>
    %c0_2 = arith.constant 0 : index
    %c0_3 = arith.constant 0 : index
    %3 = vector.load %arg5[%c0_2, %c0_3] : memref<36x286xf32, #tpu.memory_space<vmem>>, vector<4x286xf32>
    tpu.vector_store %arg5[%c0_2, %c0_3], %2 {strides = array<i32>} : memref<36x286xf32, #tpu.memory_space<vmem>>, vector<4x286xf32>,
    %4 = vector.extract_strided_slice %1 {offsets = [0, 1], sizes = [4, 286], strides = [1, 1]} : vector<4x324xf32> to vector<4x286xf32>
    %c4 = arith.constant 4 : index
    %c0_4 = arith.constant 0 : index
    %5 = vector.load %arg5[%c4, %c0_4] : memref<36x286xf32, #tpu.memory_space<vmem>>, vector<4x286xf32>
    tpu.vector_store %arg5[%c4, %c0_4], %4 {strides = array<i32>} : memref<36x286xf32, #tpu.memory_space<vmem>>, vector<4x286xf32>,
    %6 = vector.extract_strided_slice %1 {offsets = [0, 2], sizes = [4, 286], strides = [1, 1]} : vector<4x324xf32> to vector<4x286xf32>
    %c8 = arith.constant 8 : index
    %c0_5 = arith.constant 0 : index
    %7 = vector.load %arg5[%c8, %c0_5] : memref<36x286xf32, #tpu.memory_space<vmem>>, vector<4x286xf32>
    tpu.vector_store %arg5[%c8, %c0_5], %6 {strides = array<i32>} : memref<36x286xf32, #tpu.memory_space<vmem>>, vector<4x286xf32>,
    %8 = vector.extract_strided_slice %1 {offsets = [0, 18], sizes = [4, 286], strides = [1, 1]} : vector<4x324xf32> to vector<4x286xf32>
    %c12 = arith.constant 12 : index
    %c0_6 = arith.constant 0 : index
    %9 = vector.load %arg5[%c12, %c0_6] : memref<36x286xf32, #tpu.memory_space<vmem>>, vector<4x286xf32>
    tpu.vector_store %arg5[%c12, %c0_6], %8 {strides = array<i32>} : memref<36x286xf32, #tpu.memory_space<vmem>>, vector<4x286xf32>,
    %10 = vector.extract_strided_slice %1 {offsets = [0, 19], sizes = [4, 286], strides = [1, 1]} : vector<4x324xf32> to vector<4x286xf32>
    %c16 = arith.constant 16 : index
    %c0_7 = arith.constant 0 : index
    %11 = vector.load %arg5[%c16, %c0_7] : memref<36x286xf32, #tpu.memory_space<vmem>>, vector<4x286xf32>
    tpu.vector_store %arg5[%c16, %c0_7], %10 {strides = array<i32>} : memref<36x286xf32, #tpu.memory_space<vmem>>, vector<4x286xf32>,
    %12 = vector.extract_strided_slice %1 {offsets = [0, 20], sizes = [4, 286], strides = [1, 1]} : vector<4x324xf32> to vector<4x286xf32>
    %c20 = arith.constant 20 : index
    %c0_8 = arith.constant 0 : index
    %13 = vector.load %arg5[%c20, %c0_8] : memref<36x286xf32, #tpu.memory_space<vmem>>, vector<4x286xf32>
    tpu.vector_store %arg5[%c20, %c0_8], %12 {strides = array<i32>} : memref<36x286xf32, #tpu.memory_space<vmem>>, vector<4x286xf32>,
    %14 = vector.extract_strided_slice %1 {offsets = [0, 36], sizes = [4, 286], strides = [1, 1]} : vector<4x324xf32> to vector<4x286xf32>
    %c24 = arith.constant 24 : index
    %c0_9 = arith.constant 0 : index
    %15 = vector.load %arg5[%c24, %c0_9] : memref<36x286xf32, #tpu.memory_space<vmem>>, vector<4x286xf32>
    tpu.vector_store %arg5[%c24, %c0_9], %14 {strides = array<i32>} : memref<36x286xf32, #tpu.memory_space<vmem>>, vector<4x286xf32>,
    %16 = vector.extract_strided_slice %1 {offsets = [0, 37], sizes = [4, 286], strides = [1, 1]} : vector<4x324xf32> to vector<4x286xf32>
    %c28 = arith.constant 28 : index
    %c0_10 = arith.constant 0 : index
    %17 = vector.load %arg5[%c28, %c0_10] : memref<36x286xf32, #tpu.memory_space<vmem>>, vector<4x286xf32>
    tpu.vector_store %arg5[%c28, %c0_10], %16 {strides = array<i32>} : memref<36x286xf32, #tpu.memory_space<vmem>>, vector<4x286xf32>,
    %18 = vector.extract_strided_slice %1 {offsets = [0, 38], sizes = [4, 286], strides = [1, 1]} : vector<4x324xf32> to vector<4x286xf32>
    %c32 = arith.constant 32 : index
    %c0_11 = arith.constant 0 : index
    %19 = vector.load %arg5[%c32, %c0_11] : memref<36x286xf32, #tpu.memory_space<vmem>>, vector<4x286xf32>
    tpu.vector_store %arg5[%c32, %c0_11], %18 {strides = array<i32>} : memref<36x286xf32, #tpu.memory_space<vmem>>, vector<4x286xf32>,
    %c0_12 = arith.constant 0 : index
    %c0_13 = arith.constant 0 : index
    %20 = vector.load %arg2[%c0_12, %c0_13] : memref<8x36xf32, #tpu.memory_space<vmem>>, vector<8x36xf32>
    %c0_14 = arith.constant 0 : index
    %c0_15 = arith.constant 0 : index
    %21 = vector.load %arg5[%c0_14, %c0_15] : memref<36x286xf32, #tpu.memory_space<vmem>>, vector<36x286xf32>
    %cst = arith.constant dense<0.000000e+00> : vector<8x286xf32>
    %22 = tpu.matmul %20, %21, %cst {dimension_numbers = #tpu.dot_dimension_numbers<[1], [0], [0], [1], [0, 0, 1, 1], [], []>} : vector<8x36xf32>, vector<36x286xf32>, vector<8x286xf32> -> vector<8x286xf32>
    %c0_16 = arith.constant 0 : index
    %c0_17 = arith.constant 0 : index
    %23 = vector.load %arg3[%c0_16, %c0_17] : memref<8x1xf32, #tpu.memory_space<vmem>>, vector<8x1xf32>
    %24 = vector.broadcast %23 : vector<8x1xf32> to vector<8x286xf32>
    %25 = arith.addf %22, %24 : vector<8x286xf32>
    %c0_18 = arith.constant 0 : index
    %c0_19 = arith.constant 0 : index
    %c0_20 = arith.constant 0 : index
    %26 = vector.load %arg4[%c0_18, %c0_19, %c0_20] : memref<1x8x288xf32, #tpu.memory_space<vmem>>, vector<1x8x286xf32>
    %27 = vector.shape_cast %26 : vector<1x8x286xf32> to vector<8x286xf32>
    %28 = vector.shape_cast %25 : vector<8x286xf32> to vector<1x8x286xf32>
    tpu.vector_store %arg4[%c0_18, %c0_19, %c0_20], %28 {strides = array<i32>} : memref<1x8x288xf32, #tpu.memory_space<vmem>>, vector<1x8x286xf32>,
    return
  }
  func.func @transform_0(%arg0: i32) -> (i32, i32, i32) {
    %c0_i32 = arith.constant 0 : i32
    %c0_i32_0 = arith.constant 0 : i32
    %c0_i32_1 = arith.constant 0 : i32
    return %arg0, %c0_i32, %c0_i32_0 : i32, i32, i32
  }
  func.func @transform_1(%arg0: i32) -> (i32, i32) {
    %c0_i32 = arith.constant 0 : i32
    %c0_i32_0 = arith.constant 0 : i32
    %c0_i32_1 = arith.constant 0 : i32
    return %c0_i32, %c0_i32_0 : i32, i32
  }
  func.func @transform_2(%arg0: i32) -> (i32, i32) {
    %c0_i32 = arith.constant 0 : i32
    %c0_i32_0 = arith.constant 0 : i32
    %c0_i32_1 = arith.constant 0 : i32
    return %c0_i32, %c0_i32_0 : i32, i32
  }
  func.func @transform_3(%arg0: i32) -> (i32, i32, i32) {
    %c0_i32 = arith.constant 0 : i32
    %c0_i32_0 = arith.constant 0 : i32
    %c0_i32_1 = arith.constant 0 : i32
    return %arg0, %c0_i32, %c0_i32_0 : i32, i32, i32
  }
}

</mosaic_0001>

<llo_original>
// kernel: tpu_custom_call.1
$region0: #{tpu_custom_call.1}
  #allocation0 [shape = 'u32[]', space=smem, size = 0x4, offset = 0x4, fixed_abs, tag = 'smem constant byte address 0x4 - core index']
  #allocation1 [shape = 'u32[72,128]{1,0:T(1,128)}', space=vmem, size = 0x9000, scoped, tag = 'internal scratch']
  #allocation2 [shape = 'f32[36,286]{1,0:T(8,128)}', space=vmem, size = 0xf000, scoped, tag = 'scratch operand']
  %s0 = inlined_call_operand.hbm [shape: f32[2,4,324], index: 0, kind: input, shape index: {}]
  %s1 = inlined_call_operand.vmem [shape: f32[8,36], index: 1, kind: input, shape index: {}]
  %s2 = inlined_call_operand.vmem [shape: f32[8,1], index: 2, kind: input, shape index: {}]
  %s3 = inlined_call_operand.hbm [shape: f32[2,8,288], index: 3, kind: output, shape index: {}]
  %s4 = sld [smem:[#allocation0]]
  $region49: #{tpu_custom_call.1} parent=0
    _
  %s6 = ssub.s32 1, %s4
  %s7 = scalar_select 0, %s6, %s4
  $region1: #{tpu_custom_call.1} parent=0
    #allocation3 [shape = 'u8[12288]{0}', space=vmem, size = 0x3000, scoped, tag = 'input window, operand 0']
    #allocation4 [shape = 's32[2]{0}', space=sflag, size = 0x8, scoped, tag = 'scoped memory for tpu_custom_call.1']
    #allocation5 [shape = 's32[2]{0}', space=sflag, size = 0x8, scoped, tag = 'scoped memory for tpu_custom_call.1']
    #allocation6 [shape = 'u8[24576]{0}', space=vmem, size = 0x6000, scoped, tag = 'output window, operand 0']
    %8 = vsyncpa [#allocation4], 0
    %s9 = scalar_lea.sflag [#allocation4], 1
    %10 = vsyncpa %s9, 0
    %11 = vsyncpa [#allocation5], 0
    %s12 = scalar_lea.sflag [#allocation5], 1
    %13 = vsyncpa %s12, 0
    loop: start=0, step=1, limit=4
    $region2: #{tpu_custom_call.1} parent=1 // loop_pre_header
      _
    $region3: #{tpu_custom_call.1} parent=1 // loop_header
      %s15 = sphi 0, %s19
      %p16 = scmp.ge.s32.totalorder %s15, 4
      %s25 = sphi 0, %s27
      %s28 = sphi 0, %s25
      %s29 = sphi 0, %s28
      %s45 = sphi 0, %s29
      %s49 = sphi 0, %s49
      %s51 = sphi 0, %s49
      %s52 = sphi 0, %s51
      %s66 = sphi 0, %s52
      %s70 = sphi 0, %s70
      %s72 = sphi 0, %s70
      %s73 = sphi 0, %s72
      %s87 = sphi 0, %s73
      %s93 = sphi 0, %s95
      %s96 = sphi 0, %s93
      %s97 = sphi 0, %s96
      %s113 = sphi 0, %s97
    $region4: #{tpu_custom_call.1} parent=1 // loop_header_branch
      %18 = sbr.rel (%p16) target = $region8
    $region5: #{tpu_custom_call.1} parent=1 // loop_body
      %s20 = ssub.s32 %s15, 1
      %s21 = ssub.s32 %s15, 2
      %s22 = sadd.s32 %s15, 1
      %s23 = ssub.s32 %s15, %s22
      %p24 = scmp.eq.s32.totalorder %s23, 0
      %s26 = sadd.s32 %s25, 1
      %s27 = scalar_select %p24, %s25, %s26
      %p30 = pneg %p24
      %p31 = scmp.eq.s32.totalorder %s15, 1
      %p32 = por %p30, %p31
      %p33 = scmp.ne.s32.totalorder %s25, %s28
      %p34 = scmp.eq.s32.totalorder %s15, 0
      %p35 = por %p33, %p34
      %p36 = scmp.ne.s32.totalorder %s25, %s28
      %p37 = scmp.eq.s32.totalorder %s20, 1
      %p38 = por %p36, %p37
      %p39 = scmp.ne.s32.totalorder %s28, %s29
      %p40 = scmp.eq.s32.totalorder %s20, 0
      %p41 = por %p39, %p40
      %p42 = scmp.ne.s32.totalorder %s28, %s29
      %p43 = scmp.eq.s32.totalorder %s21, 1
      %p44 = por %p42, %p43
      %p46 = scmp.ne.s32.totalorder %s29, %s45
      %p47 = scmp.eq.s32.totalorder %s21, 0
      %p48 = por %p46, %p47
      %s50 = sadd.s32 %s49, 1
      %p53 = scmp.eq.s32.totalorder %s15, 1
      %p54 = scmp.ne.s32.totalorder %s49, %s51
      %p55 = scmp.eq.s32.totalorder %s15, 0
      %p56 = por %p54, %p55
      %p57 = scmp.ne.s32.totalorder %s49, %s51
      %p58 = scmp.eq.s32.totalorder %s20, 1
      %p59 = por %p57, %p58
      %p60 = scmp.ne.s32.totalorder %s51, %s52
      %p61 = scmp.eq.s32.totalorder %s20, 0
      %p62 = por %p60, %p61
      %p63 = scmp.ne.s32.totalorder %s51, %s52
      %p64 = scmp.eq.s32.totalorder %s21, 1
      %p65 = por %p63, %p64
      %p67 = scmp.ne.s32.totalorder %s52, %s66
      %p68 = scmp.eq.s32.totalorder %s21, 0
      %p69 = por %p67, %p68
      %s71 = sadd.s32 %s70, 1
      %p74 = scmp.eq.s32.totalorder %s15, 1
      %p75 = scmp.ne.s32.totalorder %s70, %s72
      %p76 = scmp.eq.s32.totalorder %s15, 0
      %p77 = por %p75, %p76
      %p78 = scmp.ne.s32.totalorder %s70, %s72
      %p79 = scmp.eq.s32.totalorder %s20, 1
      %p80 = por %p78, %p79
      %p81 = scmp.ne.s32.totalorder %s72, %s73
      %p82 = scmp.eq.s32.totalorder %s20, 0
      %p83 = por %p81, %p82
      %p84 = scmp.ne.s32.totalorder %s72, %s73
      %p85 = scmp.eq.s32.totalorder %s21, 1
      %p86 = por %p84, %p85
      %p88 = scmp.ne.s32.totalorder %s73, %s87
      %p89 = scmp.eq.s32.totalorder %s21, 0
      %p90 = por %p88, %p89
      %s91 = ssub.s32 %s15, %s22
      %p92 = scmp.eq.s32.totalorder %s91, 0
      %s94 = sadd.s32 %s93, 1
      %s95 = scalar_select %p92, %s93, %s94
      %p98 = pneg %p92
      %p99 = scmp.eq.s32.totalorder %s15, 1
      %p100 = por %p98, %p99
      %p101 = scmp.ne.s32.totalorder %s93, %s96
      %p102 = scmp.eq.s32.totalorder %s15, 0
      %p103 = por %p101, %p102
      %p104 = scmp.ne.s32.totalorder %s93, %s96
      %p105 = scmp.eq.s32.totalorder %s20, 1
      %p106 = por %p104, %p105
      %p107 = scmp.ne.s32.totalorder %s96, %s97
      %p108 = scmp.eq.s32.totalorder %s20, 0
      %p109 = por %p107, %p108
      %p110 = scmp.ne.s32.totalorder %s96, %s97
      %p111 = scmp.eq.s32.totalorder %s21, 1
      %p112 = por %p110, %p111
      %p114 = scmp.ne.s32.totalorder %s97, %s113
      %p115 = scmp.eq.s32.totalorder %s21, 0
      %p116 = por %p114, %p115
      %p117 = scmp.le.s32.totalorder 1, %s15
      %p118 = scmp.lt.s32.totalorder %s15, 3
      %p119 = pnand %p117, %p118
      %p120 = pneg %p119
      // Predicated region
      $region9: #{tpu_custom_call.1} parent=5 // pred_check
        _
      $region10: #{tpu_custom_call.1} parent=5 // pred_check_branch
        %122 = sbr.rel (%p119) target = $region12
      $region11: #{tpu_custom_call.1} parent=5 // pred_region
        %s123 = ssub.s32 %s15, 1
        // Predicated region
        $region13: #{tpu_custom_call.1} parent=11 // pred_check
          %p124 = pneg %p62
        $region14: #{tpu_custom_call.1} parent=11 // pred_check_branch
          %126 = sbr.rel (%p124) target = $region16
        $region15: #{tpu_custom_call.1} parent=11 // pred_region
          _
        $region16: #{tpu_custom_call.1} parent=11 // pred_fallthru
          _
        // Predicated region
        $region17: #{tpu_custom_call.1} parent=11 // pred_check
          %p127 = pneg %p83
        $region18: #{tpu_custom_call.1} parent=11 // pred_check_branch
          %129 = sbr.rel (%p127) target = $region20
        $region19: #{tpu_custom_call.1} parent=11 // pred_region
          _
        $region20: #{tpu_custom_call.1} parent=11 // pred_fallthru
          _
      $region12: #{tpu_custom_call.1} parent=5 // pred_fallthru
        _
      %p130 = scmp.lt.s32.totalorder %s15, 2
      // Predicated region
      $region21: #{tpu_custom_call.1} parent=5 // pred_check
        %p131 = pneg %p130
      $region22: #{tpu_custom_call.1} parent=5 // pred_check_branch
        %133 = sbr.rel (%p131) target = $region24
      $region23: #{tpu_custom_call.1} parent=5 // pred_region
        // Predicated region
        $region25: #{tpu_custom_call.1} parent=23 // pred_check
          %p134 = pneg %p35
        $region26: #{tpu_custom_call.1} parent=23 // pred_check_branch
          %136 = sbr.rel (%p134) target = $region28
        $region27: #{tpu_custom_call.1} parent=23 // pred_region
          %s137 = sand.u32 %s25, 1
          %s138 = scalar_lea.sflag [#allocation4], %s137
          %s139 = sand.u32 %s25, 1
          %s140 = smul.addr %s139, 12
          %s141 = scalar_lea.vmem [#allocation3], %s140
          %143 = vsyncadd %s138, 0
          %s144 = smul.addr %s15, 3
          %s145 = smul.addr %s144, 4
          %s146 = scalar_lea.hbm %s0, %s145
          %s148 = sshll.u32 %s146, 4
          %s149 = int_to_ptr.hbm [resolvable:$true] %s148
          %s150 = sshll.u32 %s141, 4
          %s151 = int_to_ptr.vmem [resolvable:$true] %s150
          %153 = dma.hbm_to_vmem [thread:$0]  %s149, 192, %s151, %s138
        $region28: #{tpu_custom_call.1} parent=23 // pred_fallthru
          _
      $region24: #{tpu_custom_call.1} parent=5 // pred_fallthru
        _
      %p154 = scmp.le.s32.totalorder 1, %s15
      %p155 = scmp.lt.s32.totalorder %s15, 3
      %p156 = pnand %p154, %p155
      %p157 = pneg %p156
      // Predicated region
      $region29: #{tpu_custom_call.1} parent=5 // pred_check
        _
      $region30: #{tpu_custom_call.1} parent=5 // pred_check_branch
        %159 = sbr.rel (%p156) target = $region32
      $region31: #{tpu_custom_call.1} parent=5 // pred_region
        %s160 = ssub.s32 %s15, 1
        %s161 = sand.u32 %s28, 1
        %s162 = scalar_lea.sflag [#allocation4], %s161
        %s163 = sand.u32 %s28, 1
        %s164 = smul.addr %s163, 12
        %s165 = scalar_lea.vmem [#allocation3], %s164
        // Predicated region
        $region33: #{tpu_custom_call.1} parent=31 // pred_check
          %p166 = pneg %p41
        $region34: #{tpu_custom_call.1} parent=31 // pred_check_branch
          %168 = sbr.rel (%p166) target = $region36
        $region35: #{tpu_custom_call.1} parent=31 // pred_region
          %170 = dma.done %s162, 192
        $region36: #{tpu_custom_call.1} parent=31 // pred_fallthru
          _
        %s171 = sand.u32 %s28, 1
        %s172 = scalar_lea.sflag [#allocation4], %s171
        %s173 = sand.u32 %s28, 1
        %s174 = smul.addr %s173, 12
        %s175 = scalar_lea.vmem [#allocation3], %s174
        %p176 = pneg %p41
        %p177 = pneg %p38
        %p178 = pneg %p62
        %p179 = pneg %p59
        %p180 = pneg %p83
        %p181 = pneg %p80
        %p182 = pneg %p109
        %p183 = pneg %p106
        %s184 = sand.u32 %s96, 1
        %s185 = scalar_lea.sflag [#allocation5], %s184
        %s186 = sand.u32 %s96, 1
        %s187 = smul.addr %s186, 24
        %s188 = scalar_lea.vmem [#allocation6], %s187
        %v189 = vld [vmem:[%s165] sm:$0xff]
        %v190 = vld [vmem:[%s165 + $0x8] sm:$0xf]
        %193 = vst [vmem:[#allocation1] ss:$2 sm:$0xff] %v189
        %s194 = scalar_lea.vmem [#allocation1], 16
        %195 = vst [vmem:[%s194] ss:$2 sm:$0xff] %v190
        %v196 = vld.sshfl [vmem:[#allocation1] sm:$0xff pattern:$0x75316420]
        %v197 = vld.sshfl [vmem:[#allocation1 + $0x8] sm:$0xff pattern:$0x75316420]
        %v198 = vld.sshfl [vmem:[#allocation1 + $0x10] sm:$0xff pattern:$0x75316420]
        %202 = vst [vmem:[#allocation2] sm:$0xf] %v196
        %203 = vst [vmem:[#allocation2 + $0x8] sm:$0xf] %v197
        %vm204 = vcmask 240640
        %205 = vst.msk [vmem:[#allocation2 + $0x10] sm:$0xf] %vm204, %v198
        %s206 = scalar_lea.vmem [#allocation1], 1
        %207 = vst [vmem:[%s206] ss:$2 sm:$0xff] %v189
        %s208 = scalar_lea.vmem [#allocation1], 17
        %209 = vst [vmem:[%s208] ss:$2 sm:$0xff] %v190
        %v210 = vld.sshfl [vmem:[#allocation1] sm:$0xff pattern:$0x75316420]
        %v211 = vld.sshfl [vmem:[#allocation1 + $0x8] sm:$0xff pattern:$0x75316420]
        %v212 = vld.sshfl [vmem:[#allocation1 + $0x10] sm:$0xff pattern:$0x75316420]
        %213 = vrot.lane.b32.xlu0 %v210, 127
        %v214 = vpop.permute.xlu0 %213
        %215 = vrot.lane.b32.xlu0 %v211, 127
        %v216 = vpop.permute.xlu0 %215
        %217 = vrot.lane.b32.xlu0 %v212, 127
        %v218 = vpop.permute.xlu0 %217
        %vm219 = vcmask 1039360
        %v220 = vsel %vm219, %v214, %v216
        %v221 = vsel %vm219, %v216, %v218
        %225 = vst [vmem:[#allocation2] sm:$0xf0] %v220
        %226 = vst [vmem:[#allocation2 + $0x8] sm:$0xf0] %v221
        %vm227 = vcmask 244740
        %228 = vst.msk [vmem:[#allocation2 + $0x10] sm:$0xf0] %vm227, %v218
        %229 = vst [vmem:[#allocation1] ss:$2 sm:$0xff] %v189
        %s230 = scalar_lea.vmem [#allocation1], 16
        %231 = vst [vmem:[%s230] ss:$2 sm:$0xff] %v190
        %v232 = vld.sshfl [vmem:[#allocation1] sm:$0xff pattern:$0x75316420]
        %v233 = vld.sshfl [vmem:[#allocation1 + $0x8] sm:$0xff pattern:$0x75316420]
        %v234 = vld.sshfl [vmem:[#allocation1 + $0x10] sm:$0xff pattern:$0x75316420]
        %235 = vrot.lane.b32.xlu0 %v232, 126
        %v236 = vpop.permute.xlu0 %235
        %237 = vrot.lane.b32.xlu0 %v233, 126
        %v238 = vpop.permute.xlu0 %237
        %239 = vrot.lane.b32.xlu0 %v234, 126
        %v240 = vpop.permute.xlu0 %239
        %vm241 = vcmask 1031168
        %v242 = vsel %vm241, %v236, %v238
        %v243 = vsel %vm241, %v238, %v240
        %247 = vst [vmem:[#allocation2 + $0x18] sm:$0xf] %v242
        %248 = vst [vmem:[#allocation2 + $0x20] sm:$0xf] %v243
        %249 = vst.msk [vmem:[#allocation2 + $0x28] sm:$0xf] %vm204, %v240
        %s250 = scalar_lea.vmem [#allocation1], 1
        %251 = vst [vmem:[%s250] ss:$2 sm:$0xff] %v189
        %s252 = scalar_lea.vmem [#allocation1], 17
        %253 = vst [vmem:[%s252] ss:$2 sm:$0xff] %v190
        %v254 = vld.sshfl [vmem:[#allocation1] sm:$0xff pattern:$0x75316420]
        %v255 = vld.sshfl [vmem:[#allocation1 + $0x8] sm:$0xff pattern:$0x75316420]
        %v256 = vld.sshfl [vmem:[#allocation1 + $0x10] sm:$0xff pattern:$0x75316420]
        %257 = vrot.lane.b32.xlu0 %v254, 110
        %v258 = vpop.permute.xlu0 %257
        %259 = vrot.lane.b32.xlu0 %v255, 110
        %v260 = vpop.permute.xlu0 %259
        %261 = vrot.lane.b32.xlu0 %v256, 110
        %v262 = vpop.permute.xlu0 %261
        %vm263 = vcmask 900096
        %v264 = vsel %vm263, %v258, %v260
        %v265 = vsel %vm263, %v260, %v262
        %269 = vst [vmem:[#allocation2 + $0x18] sm:$0xf0] %v264
        %270 = vst [vmem:[#allocation2 + $0x20] sm:$0xf0] %v265
        %271 = vst.msk [vmem:[#allocation2 + $0x28] sm:$0xf0] %vm227, %v262
        %272 = vst [vmem:[#allocation1] ss:$2 sm:$0xff] %v189
        %s273 = scalar_lea.vmem [#allocation1], 16
        %274 = vst [vmem:[%s273] ss:$2 sm:$0xff] %v190
        %v275 = vld.sshfl [vmem:[#allocation1] sm:$0xff pattern:$0x75316420]
        %v276 = vld.sshfl [vmem:[#allocation1 + $0x8] sm:$0xff pattern:$0x75316420]
        %v277 = vld.sshfl [vmem:[#allocation1 + $0x10] sm:$0xff pattern:$0x75316420]
        %278 = vrot.lane.b32.xlu0 %v275, 109
        %v279 = vpop.permute.xlu0 %278
        %280 = vrot.lane.b32.xlu0 %v276, 109
        %v281 = vpop.permute.xlu0 %280
        %282 = vrot.lane.b32.xlu0 %v277, 109
        %v283 = vpop.permute.xlu0 %282
        %vm284 = vcmask 891904
        %v285 = vsel %vm284, %v279, %v281
        %v286 = vsel %vm284, %v281, %v283
        %290 = vst [vmem:[#allocation2 + $0x30] sm:$0xf] %v285
        %291 = vst [vmem:[#allocation2 + $0x38] sm:$0xf] %v286
        %292 = vst.msk [vmem:[#allocation2 + $0x40] sm:$0xf] %vm204, %v283
        %s293 = scalar_lea.vmem [#allocation1], 1
        %294 = vst [vmem:[%s293] ss:$2 sm:$0xff] %v189
        %s295 = scalar_lea.vmem [#allocation1], 17
        %296 = vst [vmem:[%s295] ss:$2 sm:$0xff] %v190
        %v297 = vld.sshfl [vmem:[#allocation1] sm:$0xff pattern:$0x75316420]
        %v298 = vld.sshfl [vmem:[#allocation1 + $0x8] sm:$0xff pattern:$0x75316420]
        %v299 = vld.sshfl [vmem:[#allocation1 + $0x10] sm:$0xff pattern:$0x75316420]
        %300 = vrot.lane.b32.xlu0 %v297, 108
        %v301 = vpop.permute.xlu0 %300
        %302 = vrot.lane.b32.xlu0 %v298, 108
        %v303 = vpop.permute.xlu0 %302
        %304 = vrot.lane.b32.xlu0 %v299, 108
        %v305 = vpop.permute.xlu0 %304
        %vm306 = vcmask 883712
        %v307 = vsel %vm306, %v301, %v303
        %v308 = vsel %vm306, %v303, %v305
        %312 = vst [vmem:[#allocation2 + $0x30] sm:$0xf0] %v307
        %313 = vst [vmem:[#allocation2 + $0x38] sm:$0xf0] %v308
        %314 = vst.msk [vmem:[#allocation2 + $0x40] sm:$0xf0] %vm227, %v305
        %315 = vst [vmem:[#allocation1] ss:$2 sm:$0xff] %v189
        %s316 = scalar_lea.vmem [#allocation1], 16
        %317 = vst [vmem:[%s316] ss:$2 sm:$0xff] %v190
        %v318 = vld.sshfl [vmem:[#allocation1] sm:$0xff pattern:$0x75316420]
        %v319 = vld.sshfl [vmem:[#allocation1 + $0x8] sm:$0xff pattern:$0x75316420]
        %v320 = vld.sshfl [vmem:[#allocation1 + $0x10] sm:$0xff pattern:$0x75316420]
        %321 = vrot.lane.b32.xlu0 %v318, 92
        %v322 = vpop.permute.xlu0 %321
        %323 = vrot.lane.b32.xlu0 %v319, 92
        %v324 = vpop.permute.xlu0 %323
        %325 = vrot.lane.b32.xlu0 %v320, 92
        %v326 = vpop.permute.xlu0 %325
        %vm327 = vcmask 752640
        %v328 = vsel %vm327, %v322, %v324
        %v329 = vsel %vm327, %v324, %v326
        %333 = vst [vmem:[#allocation2 + $0x48] sm:$0xf] %v328
        %334 = vst [vmem:[#allocation2 + $0x50] sm:$0xf] %v329
        %335 = vst.msk [vmem:[#allocation2 + $0x58] sm:$0xf] %vm204, %v326
        %s336 = scalar_lea.vmem [#allocation1], 1
        %337 = vst [vmem:[%s336] ss:$2 sm:$0xff] %v189
        %s338 = scalar_lea.vmem [#allocation1], 17
        %339 = vst [vmem:[%s338] ss:$2 sm:$0xff] %v190
        %v340 = vld.sshfl [vmem:[#allocation1] sm:$0xff pattern:$0x75316420]
        %v341 = vld.sshfl [vmem:[#allocation1 + $0x8] sm:$0xff pattern:$0x75316420]
        %v342 = vld.sshfl [vmem:[#allocation1 + $0x10] sm:$0xff pattern:$0x75316420]
        %343 = vrot.lane.b32.xlu0 %v340, 91
        %v344 = vpop.permute.xlu0 %343
        %345 = vrot.lane.b32.xlu0 %v341, 91
        %v346 = vpop.permute.xlu0 %345
        %347 = vrot.lane.b32.xlu0 %v342, 91
        %v348 = vpop.permute.xlu0 %347
        %vm349 = vcmask 744448
        %v350 = vsel %vm349, %v344, %v346
        %v351 = vsel %vm349, %v346, %v348
        %355 = vst [vmem:[#allocation2 + $0x48] sm:$0xf0] %v350
        %356 = vst [vmem:[#allocation2 + $0x50] sm:$0xf0] %v351
        %357 = vst.msk [vmem:[#allocation2 + $0x58] sm:$0xf0] %vm227, %v348
        %358 = vst [vmem:[#allocation1] ss:$2 sm:$0xff] %v189
        %s359 = scalar_lea.vmem [#allocation1], 16
        %360 = vst [vmem:[%s359] ss:$2 sm:$0xff] %v190
        %v361 = vld.sshfl [vmem:[#allocation1] sm:$0xff pattern:$0x75316420]
        %v362 = vld.sshfl [vmem:[#allocation1 + $0x8] sm:$0xff pattern:$0x75316420]
        %v363 = vld.sshfl [vmem:[#allocation1 + $0x10] sm:$0xff pattern:$0x75316420]
        %364 = vrot.lane.b32.xlu0 %v361, 90
        %v365 = vpop.permute.xlu0 %364
        %366 = vrot.lane.b32.xlu0 %v362, 90
        %v367 = vpop.permute.xlu0 %366
        %368 = vrot.lane.b32.xlu0 %v363, 90
        %v369 = vpop.permute.xlu0 %368
        %vm370 = vcmask 736256
        %v371 = vsel %vm370, %v365, %v367
        %v372 = vsel %vm370, %v367, %v369
        %376 = vst [vmem:[#allocation2 + $0x60] sm:$0xf] %v371
        %377 = vst [vmem:[#allocation2 + $0x68] sm:$0xf] %v372
        %378 = vst.msk [vmem:[#allocation2 + $0x70] sm:$0xf] %vm204, %v369
        %v379 = vld [vmem:[%s1] sm:$0xff]
        %v380 = vld [vmem:[#allocation2] sm:$0xff]
        %v381 = vld [vmem:[#allocation2 + $0x8] sm:$0xff]
        %v382 = vld [vmem:[#allocation2 + $0x10] sm:$0xff]
        %v383 = vld [vmem:[#allocation2 + $0x18] sm:$0xff]
        %v384 = vld [vmem:[#allocation2 + $0x20] sm:$0xff]
        %v385 = vld [vmem:[#allocation2 + $0x28] sm:$0xff]
        %v386 = vld [vmem:[#allocation2 + $0x30] sm:$0xff]
        %v387 = vld [vmem:[#allocation2 + $0x38] sm:$0xff]
        %v388 = vld [vmem:[#allocation2 + $0x40] sm:$0xff]
        %v389 = vld [vmem:[#allocation2 + $0x48] sm:$0xff]
        %v390 = vld [vmem:[#allocation2 + $0x50] sm:$0xff]
        %v391 = vld [vmem:[#allocation2 + $0x58] sm:$0xff]
        %v392 = vld [vmem:[#allocation2 + $0x60] sm:$0xf]
        %v393 = vld [vmem:[#allocation2 + $0x68] sm:$0xf]
        %v394 = vld [vmem:[#allocation2 + $0x70] sm:$0xf]
        %v395 = vld [vmem:[%s2] sm:$0xff]
        %397 = vset.pattern.permute.xlu0 0
        %398 = vperm.xlu0 %397, %v395
        %v399 = vpop.permute.xlu0 %398
        %vm401 = vcmask 293888
        %v403 = vsel %vm401, %v379, 0
        %vm405 = vcmask 1043456
        %v407 = vsel %vm405, %v392, 0
        %v410 = vsel %vm405, %v393, 0
        %v413 = vsel %vm405, %v394, 0
        %415 = vmatpush.msra.mxu0 0.0
        %416 = vmatpush.msra.mxu0 0.0
        %417 = vmatpush.msra.mxu0 0.0
        %418 = vmatpush.msra.mxu0 0.0
        %419 = vmatpush.msra.mxu0 0.0
        %420 = vmatpush.msra.mxu0 0.0
        %421 = vmatpush.msra.mxu0 0.0
        %422 = vmatpush.msra.mxu0 0.0
        %423 = vmatpush.msra.mxu0 0.0
        %424 = vmatpush.msra.mxu0 0.0
        %425 = vmatpush.msra.mxu0 0.0
        %426 = vmatpush.msra.mxu0 %v407
        %427 = vmatpush.msra.mxu0 %v389
        %428 = vmatpush.msra.mxu0 %v386
        %429 = vmatpush.msra.mxu0 %v383
        %430 = vmatpush.msra.mxu0 %v380
        %431 = vmatmul.f32.gmra.mxu0 %v403
        %v432 = vpop.f32.mrf.mxu0
        %v433 = vadd.f32 %v399, %v432
        %434 = vdwg.mxu0
        %435 = vmatpush.msra.mxu0 0.0
        %436 = vmatpush.msra.mxu0 0.0
        %437 = vmatpush.msra.mxu0 0.0
        %438 = vmatpush.msra.mxu0 0.0
        %439 = vmatpush.msra.mxu0 0.0
        %440 = vmatpush.msra.mxu0 0.0
        %441 = vmatpush.msra.mxu0 0.0
        %442 = vmatpush.msra.mxu0 0.0
        %443 = vmatpush.msra.mxu0 0.0
        %444 = vmatpush.msra.mxu0 0.0
        %445 = vmatpush.msra.mxu0 0.0
        %446 = vmatpush.msra.mxu0 %v410
        %447 = vmatpush.msra.mxu0 %v390
        %448 = vmatpush.msra.mxu0 %v387
        %449 = vmatpush.msra.mxu0 %v384
        %450 = vmatpush.msra.mxu0 %v381
        %451 = vmatmul.f32.gmra.mxu0 %v403
        %v452 = vpop.f32.mrf.mxu0
        %v453 = vadd.f32 %v399, %v452
        %454 = vdwg.mxu0
        %455 = vmatpush.msra.mxu0 0.0
        %456 = vmatpush.msra.mxu0 0.0
        %457 = vmatpush.msra.mxu0 0.0
        %458 = vmatpush.msra.mxu0 0.0
        %459 = vmatpush.msra.mxu0 0.0
        %460 = vmatpush.msra.mxu0 0.0
        %461 = vmatpush.msra.mxu0 0.0
        %462 = vmatpush.msra.mxu0 0.0
        %463 = vmatpush.msra.mxu0 0.0
        %464 = vmatpush.msra.mxu0 0.0
        %465 = vmatpush.msra.mxu0 0.0
        %466 = vmatpush.msra.mxu0 %v413
        %467 = vmatpush.msra.mxu0 %v391
        %468 = vmatpush.msra.mxu0 %v388
        %469 = vmatpush.msra.mxu0 %v385
        %470 = vmatpush.msra.mxu0 %v382
        %471 = vmatmul.f32.gmra.mxu0 %v403
        %v472 = vpop.f32.mrf.mxu0
        %v473 = vadd.f32 %v399, %v472
        %474 = vdwg.mxu0
        %475 = vst [vmem:[%s188] sm:$0xff] %v433
        %476 = vst [vmem:[%s188 + $0x8] sm:$0xff] %v453
        %vm477 = vcmask 244736
        %478 = vst.msk [vmem:[%s188 + $0x10] sm:$0xff] %vm477, %v473
        %s479 = sand.u32 %s96, 1
        %s480 = scalar_lea.sflag [#allocation5], %s479
        %s481 = sand.u32 %s96, 1
        %s482 = smul.addr %s481, 24
        %s483 = scalar_lea.vmem [#allocation6], %s482
        // Predicated region
        $region37: #{tpu_custom_call.1} parent=31 // pred_check
          %p484 = pneg %p106
        $region38: #{tpu_custom_call.1} parent=31 // pred_check_branch
          %486 = sbr.rel (%p484) target = $region40
        $region39: #{tpu_custom_call.1} parent=31 // pred_region
          %488 = vsyncadd %s480, 0
          %s489 = smul.addr %s20, 3
          %s490 = smul.addr %s489, 8
          %s491 = scalar_lea.hbm %s3, %s490
          %s493 = sshll.u32 %s483, 4
          %s494 = int_to_ptr.vmem [resolvable:$true] %s493
          %s495 = sshll.u32 %s491, 4
          %s496 = int_to_ptr.hbm [resolvable:$true] %s495
          %498 = dma.vmem_to_hbm [thread:$0]  %s494, 384, %s496, %s480
        $region40: #{tpu_custom_call.1} parent=31 // pred_fallthru
          _
      $region32: #{tpu_custom_call.1} parent=5 // pred_fallthru
        _
      %p499 = scmp.le.s32.totalorder 2, %s15
      // Predicated region
      $region41: #{tpu_custom_call.1} parent=5 // pred_check
        %p500 = pneg %p499
      $region42: #{tpu_custom_call.1} parent=5 // pred_check_branch
        %502 = sbr.rel (%p500) target = $region44
      $region43: #{tpu_custom_call.1} parent=5 // pred_region
        %s503 = ssub.s32 %s15, 2
        // Predicated region
        $region45: #{tpu_custom_call.1} parent=43 // pred_check
          %p504 = pneg %p112
        $region46: #{tpu_custom_call.1} parent=43 // pred_check_branch
          %506 = sbr.rel (%p504) target = $region48
        $region47: #{tpu_custom_call.1} parent=43 // pred_region
          %s507 = sand.u32 %s97, 1
          %s508 = scalar_lea.sflag [#allocation5], %s507
          %s509 = sand.u32 %s97, 1
          %s510 = smul.addr %s509, 24
          %s511 = scalar_lea.vmem [#allocation6], %s510
          %513 = dma.done %s508, 384
        $region48: #{tpu_custom_call.1} parent=43 // pred_fallthru
          _
      $region44: #{tpu_custom_call.1} parent=5 // pred_fallthru
        _
    $region6: #{tpu_custom_call.1} parent=1 // loop_footer
      %s19 = sadd.s32 1, %s15
    $region7: #{tpu_custom_call.1} parent=1 // loop_footer_branch
      %14 = sbr.rel target = $region3
    $region8: #{tpu_custom_call.1} parent=1 // loop_exit
      _
    %514 = vsyncpa [#allocation4], 1
    %s515 = scalar_lea.sflag [#allocation4], 1
    %516 = vsyncpa %s515, 1
    %517 = vsyncpa [#allocation5], 1
    %s518 = scalar_lea.sflag [#allocation5], 1
    %519 = vsyncpa %s518, 1

</llo_original>
